<compile_context>
chip_gen: v7x
topology: tpu7x:2x2x1
jax: 0.10.0
libtpu: 0.0.40
codegen_flags: <defaults>
</compile_context>

<pallas_src>
import math

import jax
import jax.numpy as jnp
from jax.experimental import pallas as pl
from jax.experimental.pallas import tpu as pltpu


def _round_up(x, m):
    return (x + m - 1) // m * m


# ---------------------------------------------------------------------------
# Path 1: embedding table resident in VMEM, batched one-hot MXU gather.
# ---------------------------------------------------------------------------
def _embed_vmem_table(flat_ids, table, scale):
    (N,) = flat_ids.shape
    V, D = table.shape

    # Pad vocab to a lane multiple so the one-hot contraction is MXU-dense and
    # so out-of-range ids (already clamped in the wrapper) can never select
    # garbage rows.
    V_pad = _round_up(V, 128)
    if V_pad != V:
        table = jnp.pad(table, ((0, V_pad - V), (0, 0)))

    # Token block: multiple of 8 (sublanes), capped by N and by a ~2 MiB output
    # slab budget so total VMEM (table + one-hot + double-buffered output) stays
    # well inside the 32 MiB scoped limit on every generation (incl. v7x's
    # 64 MiB physical VMEM).
    bytes_per_row = D * jnp.dtype(table.dtype).itemsize
    max_tok_by_vmem = max(8, ((2 * 1024 * 1024) // bytes_per_row) // 8 * 8)
    tok_blk = min(512, max_tok_by_vmem, _round_up(N, 8))
    tok_blk = max(8, (tok_blk // 8) * 8)

    N_pad = _round_up(N, tok_blk)
    ids2 = jnp.pad(flat_ids, (0, N_pad - N)).reshape(N_pad, 1)

    def kernel(ids_ref, tab_ref, out_ref):
        ids_blk = ids_ref[...]                                          # (tok_blk, 1) i32
        vocab_ids = jax.lax.broadcasted_iota(jnp.int32, (tok_blk, V_pad), 1)
        onehot = (ids_blk == vocab_ids).astype(tab_ref.dtype)           # (tok_blk, V_pad)
        rows = jnp.dot(onehot, tab_ref[...], preferred_element_type=jnp.float32)
        out_ref[...] = (rows * jnp.float32(scale)).astype(out_ref.dtype)

    out = pl.pallas_call(
        kernel,
        out_shape=jax.ShapeDtypeStruct((N_pad, D), table.dtype),
        grid=(N_pad // tok_blk,),
        in_specs=[
            pl.BlockSpec((tok_blk, 1), lambda i: (i, 0)),
            # Same block index every step -> table DMA'd once, stays resident.
            pl.BlockSpec((V_pad, D), lambda i: (0, 0)),
        ],
        out_specs=pl.BlockSpec((tok_blk, D), lambda i: (i, 0)),
        compiler_params=pltpu.CompilerParams(
            # Token blocks are independent -> shard across both TCs on v7x
            # (neutral on v5e/v6e).
            dimension_semantics=("parallel",),
            vmem_limit_bytes=32 * 1024 * 1024,
        ),
    )(ids2, table)
    return out[:N]


# ---------------------------------------------------------------------------
# Path 2 (fallback, large vocab): data-dependent row gather via scalar prefetch.
# ---------------------------------------------------------------------------
def _embed_row_gather(flat_ids, table, scale):
    (N,) = flat_ids.shape
    V, D = table.shape

    def kernel(ids_sref, row_ref, out_ref):
        # Gather index was consumed by the index_map; body is scale-and-store.
        del ids_sref
        out_ref[...] = row_ref[...] * jnp.asarray(scale, dtype=row_ref.dtype)

    return pl.pallas_call(
        kernel,
        out_shape=jax.ShapeDtypeStruct((N, D), table.dtype),
        grid_spec=pltpu.PrefetchScalarGridSpec(
            num_scalar_prefetch=1,
            grid=(N,),
            in_specs=[pl.BlockSpec((1, D), lambda i, ids: (ids[i], 0),
                                   pipeline_mode=pl.Buffered(4))],
            out_specs=pl.BlockSpec((1, D), lambda i, ids: (i, 0)),
        ),
        compiler_params=pltpu.CompilerParams(
            dimension_semantics=("parallel",)),
    )(flat_ids, table)


# ---------------------------------------------------------------------------
# Public forward (matches Embeddings.forward).
# ---------------------------------------------------------------------------
def embeddings_forward(ids, table, scale_embedding=True):
    """ids: (B, S) int32 token indices; table: (vocab, d_model) float32."""
    B, S = ids.shape
    V, D = table.shape
    scale = float(D) ** 0.5 if scale_embedding else 1.0

    # Clamp ids so a bad index can never drive an out-of-bounds gather.
    flat_ids = jnp.clip(ids.reshape(B * S).astype(jnp.int32), 0, V - 1)

    table_bytes = V * D * jnp.dtype(table.dtype).itemsize
    if table_bytes <= 6 * 1024 * 1024 and V <= 4096:
        out_flat = _embed_vmem_table(flat_ids, table, scale)
    else:
        # TODO(synk): large-vocab path still gathers one row per grid step; a
        # manual double-buffered multi-row DMA gather would be faster.
        out_flat = _embed_row_gather(flat_ids, table, scale)
    return out_flat.reshape(B, S, D)


def init_embedding_table(key, vocab, d_model, padding_idx=0):
    """Deterministic stand-in for nn.Embedding init (N(0,1), padding row zeroed)."""
    w = jax.random.normal(key, (vocab, d_model), dtype=jnp.float32)
    w = w.at[padding_idx].set(0.0)
    return w


if __name__ == "__main__":
    # Small shapes consistent with the module: batch=2, seq=8, vocab=40, d_model=128.
    B, S, VOCAB, D_MODEL = 2, 8, 40, 128
    key = jax.random.PRNGKey(0)
    k_tab, k_ids = jax.random.split(key)

    table = init_embedding_table(k_tab, VOCAB, D_MODEL, padding_idx=0)
    ids = jax.random.randint(k_ids, (B, S), minval=0, maxval=VOCAB, dtype=jnp.int32)

    out = embeddings_forward(ids, table, scale_embedding=True)
    out = jax.block_until_ready(out)

    # Pure-JAX reference check (embedding lookup + sqrt(d_model) scaling).
    ref = jnp.take(table, ids, axis=0) * math.sqrt(D_MODEL)
    assert out.shape == (B, S, D_MODEL)
    assert jnp.allclose(out, ref, atol=1e-4, rtol=1e-5), float(jnp.max(jnp.abs(out - ref)))

    print("KERNEL_OK")
</pallas_src>

<mosaic_0001>
module attributes {stable_mosaic.version = 11 : i64} {
  func.func @kernel(%arg0: i32, %arg1: memref<16x1xi32, #tpu.memory_space<vmem>>, %arg2: memref<128x128xf32, #tpu.memory_space<vmem>>, %arg3: memref<16x128xf32, #tpu.memory_space<vmem>>) attributes {dimension_semantics = [#tpu.dimension_semantics<parallel>], iteration_bounds = array<i64: 1>, scalar_prefetch = 0 : i64, scratch_operands = 0 : i64, tpu.core_type = #tpu.core_type<tc>, window_params = [{transform_indices = @transform_0, window_bounds = array<i64: 16, 1>}, {pipeline_mode = #tpu.pipeline_mode<synchronous>, transform_indices = @transform_1, window_bounds = array<i64: 128, 128>}, {transform_indices = @transform_2, window_bounds = array<i64: 16, 128>}]} {
    %c0 = arith.constant 0 : index
    %c0_0 = arith.constant 0 : index
    %0 = vector.load %arg1[%c0, %c0_0] : memref<16x1xi32, #tpu.memory_space<vmem>>, vector<16x1xi32>
    %1 = tpu.iota {dimensions = array<i32: 1>} : vector<16x128xi32>
    %2 = vector.broadcast %0 : vector<16x1xi32> to vector<16x128xi32>
    %3 = arith.cmpi eq, %2, %1 : vector<16x128xi32>
    %4 = arith.extui %3 : vector<16x128xi1> to vector<16x128xi32>
    %5 = arith.sitofp %4 : vector<16x128xi32> to vector<16x128xf32>
    %c0_1 = arith.constant 0 : index
    %c0_2 = arith.constant 0 : index
    %6 = vector.load %arg2[%c0_1, %c0_2] : memref<128x128xf32, #tpu.memory_space<vmem>>, vector<128x128xf32>
    %cst = arith.constant dense<0.000000e+00> : vector<16x128xf32>
    %7 = tpu.matmul %5, %6, %cst {dimension_numbers = #tpu.dot_dimension_numbers<[1], [0], [0], [1], [0, 0, 1, 1], [], []>} : vector<16x128xf32>, vector<128x128xf32>, vector<16x128xf32> -> vector<16x128xf32>
    %cst_3 = arith.constant 11.3137083 : f32
    %8 = vector.broadcast %cst_3 : f32 to vector<16x128xf32>
    %9 = arith.mulf %7, %8 : vector<16x128xf32>
    %c0_4 = arith.constant 0 : index
    %c0_5 = arith.constant 0 : index
    %10 = vector.load %arg3[%c0_4, %c0_5] : memref<16x128xf32, #tpu.memory_space<vmem>>, vector<16x128xf32>
    tpu.vector_store %arg3[%c0_4, %c0_5], %9 {strides = array<i32>} : memref<16x128xf32, #tpu.memory_space<vmem>>, vector<16x128xf32>,
    return
  }
  func.func @transform_0(%arg0: i32) -> (i32, i32) {
    %c0_i32 = arith.constant 0 : i32
    %c0_i32_0 = arith.constant 0 : i32
    return %arg0, %c0_i32 : i32, i32
  }
  func.func @transform_1(%arg0: i32) -> (i32, i32) {
    %c0_i32 = arith.constant 0 : i32
    %c0_i32_0 = arith.constant 0 : i32
    %c0_i32_1 = arith.constant 0 : i32
    return %c0_i32, %c0_i32_0 : i32, i32
  }
  func.func @transform_2(%arg0: i32) -> (i32, i32) {
    %c0_i32 = arith.constant 0 : i32
    %c0_i32_0 = arith.constant 0 : i32
    return %arg0, %c0_i32 : i32, i32
  }
}

</mosaic_0001>

<llo_original>
// kernel: tpu_custom_call.1
$region0: #{tpu_custom_call.1}
  #allocation0 [shape = 'u32[]', space=smem, size = 0x4, offset = 0x4, fixed_abs, tag = 'smem constant byte address 0x4 - core index']
  #allocation1 [shape = 'u32[144,128]{1,0:T(1,128)}', space=vmem, size = 0x12000, scoped, tag = 'internal scratch']
  %s0 = inlined_call_operand.vmem [shape: s32[16,1], index: 0, kind: input, shape index: {}]
  %s1 = inlined_call_operand.hbm [shape: f32[128,128], index: 1, kind: input, shape index: {}]
  %s2 = inlined_call_operand.hbm [shape: f32[16,128], index: 2, kind: output, shape index: {}]
  %s3 = sld [smem:[#allocation0]]
  $region22: #{tpu_custom_call.1} parent=0
    _
  %s5 = ssub.s32 1, %s3
  %s6 = scalar_select 0, %s5, %s3
  $region1: #{tpu_custom_call.1} parent=0
    #allocation2 [shape = 'u8[65536]{0}', space=vmem, size = 0x10000, scoped, tag = 'input window, operand 1, single buffered']
    #allocation3 [shape = 's32[1]{0}', space=sflag, size = 0x4, scoped, tag = 'scoped memory for tpu_custom_call.1']
    #allocation4 [shape = 's32[1]{0}', space=sflag, size = 0x4, scoped, tag = 'scoped memory for tpu_custom_call.1']
    #allocation5 [shape = 'u8[8192]{0}', space=vmem, size = 0x2000, scoped, tag = 'output window, operand 0, single buffered']
    %7 = vsyncpa [#allocation3], 0
    %8 = vsyncpa [#allocation4], 0
    // Predicated region
    $region2: #{tpu_custom_call.1} parent=1 // pred_check
      _
    $region3: #{tpu_custom_call.1} parent=1 // pred_check_branch
      %10 = sbr.rel (0) target = $region5
    $region4: #{tpu_custom_call.1} parent=1 // pred_region
      _
    $region5: #{tpu_custom_call.1} parent=1 // pred_fallthru
      _
    // Predicated region
    $region6: #{tpu_custom_call.1} parent=1 // pred_check
      _
    $region7: #{tpu_custom_call.1} parent=1 // pred_check_branch
      %12 = sbr.rel (0) target = $region9
    $region8: #{tpu_custom_call.1} parent=1 // pred_region
      %s14 = ssub.s32 2048, 2048
      %15 = vsyncadd [#allocation3], %s14
      %s16 = sshll.u32 [#allocation2], 4
      %s17 = int_to_ptr.vmem [resolvable:$true] %s16
      %22 = dma.hbm_to_vmem [thread:$0]  %s1, 2048, %s17, [#allocation3], 128, 128, 8
    $region9: #{tpu_custom_call.1} parent=1 // pred_fallthru
      _
    // Predicated region
    $region10: #{tpu_custom_call.1} parent=1 // pred_check
      _
    $region11: #{tpu_custom_call.1} parent=1 // pred_check_branch
      %24 = sbr.rel (0) target = $region13
    $region12: #{tpu_custom_call.1} parent=1 // pred_region
      %25 = dma.done [#allocation3], 2048
    $region13: #{tpu_custom_call.1} parent=1 // pred_fallthru
      _
    %v26 = vld [vmem:[%s0] sm:$0xff]
    %v27 = vld [vmem:[%s0 + $0x8] sm:$0xff]
    %v28 = vlaneseq
    %v29 = vand.u32 %v28, 127
    %30 = vset.pattern.permute.xlu0 0
    %31 = vperm.xlu0 %30, %v26
    %v32 = vpop.permute.xlu0 %31
    %33 = vset.pattern.permute.xlu0 0
    %34 = vperm.xlu0 %33, %v27
    %v35 = vpop.permute.xlu0 %34
    %vm36 = vcmp.eq.s32.totalorder %v32, %v29
    %vm37 = vcmp.eq.s32.totalorder %v35, %v29
    %v38 = vsel %vm36, 1, 0
    %v39 = vsel %vm37, 1, 0
    %v40 = vcvt.s32.f32 %v38
    %v41 = vcvt.s32.f32 %v39
    %v42 = vld [vmem:[#allocation2] sm:$0xff]
    %v43 = vld [vmem:[#allocation2 + $0x8] sm:$0xff]
    %v44 = vld [vmem:[#allocation2 + $0x10] sm:$0xff]
    %v45 = vld [vmem:[#allocation2 + $0x18] sm:$0xff]
    %v46 = vld [vmem:[#allocation2 + $0x20] sm:$0xff]
    %v47 = vld [vmem:[#allocation2 + $0x28] sm:$0xff]
    %v48 = vld [vmem:[#allocation2 + $0x30] sm:$0xff]
    %v49 = vld [vmem:[#allocation2 + $0x38] sm:$0xff]
    %v50 = vld [vmem:[#allocation2 + $0x40] sm:$0xff]
    %v51 = vld [vmem:[#allocation2 + $0x48] sm:$0xff]
    %v52 = vld [vmem:[#allocation2 + $0x50] sm:$0xff]
    %v53 = vld [vmem:[#allocation2 + $0x58] sm:$0xff]
    %v54 = vld [vmem:[#allocation2 + $0x60] sm:$0xff]
    %v55 = vld [vmem:[#allocation2 + $0x68] sm:$0xff]
    %v56 = vld [vmem:[#allocation2 + $0x70] sm:$0xff]
    %v57 = vld [vmem:[#allocation2 + $0x78] sm:$0xff]
    %58 = vmatprep.subr.mxu0 0.0
    %59 = vmatpush1.msra.mxu0 %v42
    %60 = vmatprep.subr.mxu0 0.0
    %61 = vmatpush1.msra.mxu0 %v43
    %62 = vmatprep.subr.mxu0 0.0
    %63 = vmatpush1.msra.mxu0 %v44
    %64 = vmatprep.subr.mxu0 0.0
    %65 = vmatpush1.msra.mxu0 %v45
    %66 = vmatprep.subr.mxu0 0.0
    %67 = vmatpush1.msra.mxu0 %v46
    %68 = vmatprep.subr.mxu0 0.0
    %69 = vmatpush1.msra.mxu0 %v47
    %70 = vmatprep.subr.mxu0 0.0
    %71 = vmatpush1.msra.mxu0 %v48
    %72 = vmatprep.subr.mxu0 0.0
    %73 = vmatpush1.msra.mxu0 %v49
    %74 = vmatprep.subr.mxu0 0.0
    %75 = vmatpush1.msra.mxu0 %v50
    %76 = vmatprep.subr.mxu0 0.0
    %77 = vmatpush1.msra.mxu0 %v51
    %78 = vmatprep.subr.mxu0 0.0
    %79 = vmatpush1.msra.mxu0 %v52
    %80 = vmatprep.subr.mxu0 0.0
    %81 = vmatpush1.msra.mxu0 %v53
    %82 = vmatprep.subr.mxu0 0.0
    %83 = vmatpush1.msra.mxu0 %v54
    %84 = vmatprep.subr.mxu0 0.0
    %85 = vmatpush1.msra.mxu0 %v55
    %86 = vmatprep.subr.mxu0 0.0
    %87 = vmatpush1.msra.mxu0 %v56
    %88 = vmatprep.subr.mxu0 0.0
    %89 = vmatpush1.msra.mxu0 %v57
    %90 = vmatprep.subr.mxu0 0.0
    %91 = vmatpush1.msra.mxu0 0.0
    %92 = vmatprep.subr.mxu0 0.0
    %93 = vmatpush1.msra.mxu0 0.0
    %94 = vmatprep.subr.mxu0 0.0
    %95 = vmatpush1.msra.mxu0 0.0
    %96 = vmatprep.subr.mxu0 0.0
    %97 = vmatpush1.msra.mxu0 0.0
    %98 = vmatprep.subr.mxu0 0.0
    %99 = vmatpush1.msra.mxu0 0.0
    %100 = vmatprep.subr.mxu0 0.0
    %101 = vmatpush1.msra.mxu0 0.0
    %102 = vmatprep.subr.mxu0 0.0
    %103 = vmatpush1.msra.mxu0 0.0
    %104 = vmatprep.subr.mxu0 0.0
    %105 = vmatpush1.msra.mxu0 0.0
    %106 = vmatprep.subr.mxu0 0.0
    %107 = vmatpush1.msra.mxu0 0.0
    %108 = vmatprep.subr.mxu0 0.0
    %109 = vmatpush1.msra.mxu0 0.0
    %110 = vmatprep.subr.mxu0 0.0
    %111 = vmatpush1.msra.mxu0 0.0
    %112 = vmatprep.subr.mxu0 0.0
    %113 = vmatpush1.msra.mxu0 0.0
    %114 = vmatprep.subr.mxu0 0.0
    %115 = vmatpush1.msra.mxu0 0.0
    %116 = vmatprep.subr.mxu0 0.0
    %117 = vmatpush1.msra.mxu0 0.0
    %118 = vmatprep.subr.mxu0 0.0
    %119 = vmatpush1.msra.mxu0 0.0
    %120 = vmatprep.subr.mxu0 0.0
    %121 = vmatpush1.msra.mxu0 0.0
    %122 = vmatprep.mubr.f32.mxu0 0.0
    %123 = vmatmul.mubr.f32.gmra.mrb[0].mxu0 %v40
    %v124 = vpop.f32.mrb[0].mxu0
    %v125 = vadd.f32 0.0, %v124
    %v126 = vpop.f32.mrb[0].mxu0
    %127 = vmatprep.mubr.f32.mxu0 0.0
    %128 = vmatmul.mubr.f32.gmra.mrb[0].mxu0 %v41
    %v129 = vpop.f32.mrb[0].mxu0
    %v130 = vadd.f32 0.0, %v129
    %v131 = vpop.f32.mrb[0].mxu0
    %132 = vdwg.mxu0
    %v133 = vmul.f32 %v125, 11.313708
    %v134 = vmul.f32 %v130, 11.313708
    %135 = vst [vmem:[#allocation5] sm:$0xff] %v133
    %136 = vst [vmem:[#allocation5 + $0x8] sm:$0xff] %v134
    // Predicated region
    $region14: #{tpu_custom_call.1} parent=1 // pred_check
      _
    $region15: #{tpu_custom_call.1} parent=1 // pred_check_branch
      %138 = sbr.rel (0) target = $region17
    $region16: #{tpu_custom_call.1} parent=1 // pred_region
      %s140 = ssub.s32 256, 256
      %141 = vsyncadd [#allocation4], %s140
      %s142 = sshll.u32 [#allocation5], 4
      %s143 = int_to_ptr.vmem [resolvable:$true] %s142
      %148 = dma.vmem_to_hbm [thread:$0]  %s143, 256, %s2, [#allocation4], 128, 128, 8
    $region17: #{tpu_custom_call.1} parent=1 // pred_fallthru
      _
    // Predicated region
    $region18: #{tpu_custom_call.1} parent=1 // pred_check
      _
    $region19: #{tpu_custom_call.1} parent=1 // pred_check_branch
      %150 = sbr.rel (0) target = $region21
    $region20: #{tpu_custom_call.1} parent=1 // pred_region
      %151 = dma.done [#allocation4], 256
    $region21: #{tpu_custom_call.1} parent=1 // pred_fallthru
      _
    %152 = vsyncpa [#allocation3], 1
    %153 = vsyncpa [#allocation4], 1

</llo_original>
